<compile_context>
chip_gen: v5e
topology: v5e:2x2
jax: 0.10.0
libtpu: 0.0.40
codegen_flags: <defaults>
</compile_context>

<pallas_src>
import jax
import jax.numpy as jnp
import numpy as np
from jax.experimental import pallas as pl
from jax.experimental.pallas import tpu as pltpu

BN_EPS = 1e-5
FOLD = 8  # batch rows folded into one lane-dense row (one sublane's worth)


def _round_up(x, m):
    return ((x + m - 1) // m) * m


def lamnet_kernel(x_ref, wd_ref, wh_ref, head_ref, out_ref):
    """Fused forward on one batch tile (batch-folded, lane-dense layout).

    x_ref    : (TB, 8*F)         8 batch rows per folded row (BN folded into wd)
    wd_ref   : (8*F + 1, 8*2H)   kron(I8, blockdiag(W1, W2)), bias row appended
    wh_ref   : (8*2H + 1, 8*H)   kron(I8, Wh),                bias row appended
    head_ref : (8*H + 1, 8)      kron(I8, Wp),                bias row appended
    out_ref  : (TB, 8)           column j = output of batch row 8*r + j
    """
    k0 = wd_ref.shape[0] - 1
    k1 = wh_ref.shape[0] - 1
    k2 = head_ref.shape[0] - 1

    x = x_ref[...]                                             # (TB, 8F), compute dtype

    # Both branch linears (BN already folded in) in one MXU matmul.
    h = jnp.dot(x, wd_ref[:k0, :],
                preferred_element_type=jnp.float32) + wd_ref[k0:, :]
    h = jnp.maximum(h, 0.0)                                    # (TB, 8*2H) f32

    z = jnp.dot(h.astype(wh_ref.dtype), wh_ref[:k1, :],
                preferred_element_type=jnp.float32) + wh_ref[k1:, :]
    z = jnp.maximum(z, 0.0)                                    # (TB, 8*H) f32

    o = jnp.dot(z.astype(head_ref.dtype), head_ref[:k2, :],
                preferred_element_type=jnp.float32) + head_ref[k2:, :]  # (TB, 8)

    # sigmoid(o) * 100 via EUP exp + reciprocal (approx=False keeps the result
    # bit-close to the reference; approx=True is a further micro-opt).
    out_ref[...] = (100.0 * pl.reciprocal(1.0 + jnp.exp(-o), approx=False)
                    ).astype(out_ref.dtype)


def lamnet_forward(x, params, n_input1, *, block_fold=2048,
                   compute_dtype=jnp.float32):
    """Fused LamNetSeperate forward.

    block_fold   : batch tile in folded rows (1 folded row = FOLD batch rows).
                   Default 2048 (= 16384 batch rows/step) uses ~12 MiB VMEM
                   incl. double buffers -> fits v7x's 64 MiB physical VMEM; if
                   pushed much higher set CompilerParams(vmem_limit_bytes=...).
    compute_dtype: jnp.float32 or jnp.bfloat16 for x / weights fed to the MXU;
                   elementwise math (ReLU / sigmoid) stays f32 in-kernel.
    """
    x = x.astype(jnp.float32)
    B, F = x.shape
    H = params["wh"].shape[1]
    if params["wp"].shape[1] != 1:
        raise NotImplementedError("kernel head is specialized to n_output == 1")

    # --- full-batch BatchNorm statistics (training mode, biased variance) ---
    # TODO(synk): x is read from HBM twice (once here by XLA for the stats, once
    # by the kernel); an in-kernel two-phase stats pass would remove the 2nd read.
    mean = jnp.mean(x, axis=0, keepdims=True)
    var = jnp.mean((x - mean) ** 2, axis=0, keepdims=True)
    scale = params["gamma"] * jax.lax.rsqrt(var + BN_EPS)            # (1, F)
    shift = params["beta"] - mean * scale                            # (1, F)

    # --- pack the two branch linears block-diagonally, fold the BN affine in ---
    n1 = n_input1
    wd = jnp.zeros((F, 2 * H), jnp.float32)
    wd = wd.at[:n1, :H].set(params["w1"])
    wd = wd.at[n1:, H:].set(params["w2"])
    bd = jnp.concatenate([params["b1"], params["b2"]], axis=1)       # (1, 2H)
    wd_bn = scale.reshape(F, 1) * wd                                 # scale rows
    bd_bn = bd + shift @ wd                                          # fold shift

    # --- 8-way batch folding: replicate every weight block-diagonally ---
    eye = jnp.eye(FOLD, dtype=jnp.float32)
    wd_big = jnp.concatenate([jnp.kron(eye, wd_bn),
                              jnp.tile(bd_bn, (1, FOLD))], axis=0)           # (8F+1, 8*2H)
    wh_big = jnp.concatenate([jnp.kron(eye, params["wh"]),
                              jnp.tile(params["bh"], (1, FOLD))], axis=0)    # (8*2H+1, 8H)
    hp_big = jnp.concatenate([jnp.kron(eye, params["wp"]),
                              jnp.tile(params["bp"], (1, FOLD))], axis=0)    # (8H+1, 8)
    wd_big = wd_big.astype(compute_dtype)
    wh_big = wh_big.astype(compute_dtype)
    hp_big = hp_big.astype(compute_dtype)

    # --- fold 8 batch rows per lane-dense row; pad + tile the folded batch ---
    b8 = _round_up(max(B, 1), FOLD)
    if b8 != B:
        x = jnp.pad(x, ((0, b8 - B), (0, 0)))
    xf = x.reshape(b8 // FOLD, FOLD * F)                             # (b_fold, 8F)
    b_fold = xf.shape[0]

    tb = min(block_fold, _round_up(b_fold, 8))
    if _round_up(b_fold, 8) >= 16:
        # keep >= 2 grid steps so v7x's second TensorCore has work
        tb = min(tb, _round_up(pl.cdiv(_round_up(b_fold, 8), 2), 8))
    bfp = _round_up(b_fold, tb)
    if bfp != b_fold:
        xf = jnp.pad(xf, ((0, bfp - b_fold), (0, 0)))
    xf = xf.astype(compute_dtype)
    grid = (bfp // tb,)

    out = pl.pallas_call(
        lamnet_kernel,
        out_shape=jax.ShapeDtypeStruct((bfp, FOLD), jnp.float32),
        grid=grid,
        in_specs=[
            pl.BlockSpec((tb, FOLD * F), lambda i: (i, 0)),          # x: batch-tiled
            pl.BlockSpec(wd_big.shape, lambda i: (0, 0)),            # resident weights
            pl.BlockSpec(wh_big.shape, lambda i: (0, 0)),
            pl.BlockSpec(hp_big.shape, lambda i: (0, 0)),
        ],
        out_specs=pl.BlockSpec((tb, FOLD), lambda i: (i, 0)),
        compiler_params=pltpu.CompilerParams(
            dimension_semantics=("parallel",)),                      # megacore on v7x
    )(xf, wd_big, wh_big, hp_big)

    # unfold (b_fold, 8) -> (B, 1); padded tail rows are sliced off
    return out.reshape(bfp * FOLD, 1)[:B]


def init_params(key, n_input1, n_input2, n_hidden, n_output=1):
    """Deterministic init matching the module's parameter shapes.
    Linear weights stored transposed: (in_features, out_features)."""
    ks = jax.random.split(key, 8)

    def lin(kw, kb, n_in, n_out):
        bound = 1.0 / np.sqrt(n_in)   # PyTorch Linear default uniform bound
        w = jax.random.uniform(kw, (n_in, n_out), jnp.float32, -bound, bound)
        b = jax.random.uniform(kb, (1, n_out), jnp.float32, -bound, bound)
        return w, b

    w1, b1 = lin(ks[0], ks[1], n_input1, n_hidden)
    w2, b2 = lin(ks[2], ks[3], n_input2, n_hidden)
    wh, bh = lin(ks[4], ks[5], 2 * n_hidden, n_hidden)
    wp, bp = lin(ks[6], ks[7], n_hidden, n_output)

    F = n_input1 + n_input2
    return {
        "gamma": jnp.ones((1, F), jnp.float32),   # BatchNorm1d weight init
        "beta": jnp.zeros((1, F), jnp.float32),   # BatchNorm1d bias init
        "w1": w1, "b1": b1,
        "w2": w2, "b2": b2,
        "wh": wh, "bh": bh,
        "wp": wp, "bp": bp,
    }


def reference_forward(x, params, n_input1):
    """Pure-JAX reference mirroring the PyTorch module (training-mode BN)."""
    mean = jnp.mean(x, axis=0, keepdims=True)
    var = jnp.mean((x - mean) ** 2, axis=0, keepdims=True)
    xn = (x - mean) / jnp.sqrt(var + BN_EPS) * params["gamma"] + params["beta"]
    x1, x2 = xn[:, :n_input1], xn[:, n_input1:]
    h1 = jax.nn.relu(x1 @ params["w1"] + params["b1"])
    h2 = jax.nn.relu(x2 @ params["w2"] + params["b2"])
    z = jax.nn.relu(jnp.concatenate([h1, h2], axis=1) @ params["wh"] + params["bh"])
    return jax.nn.sigmoid(z @ params["wp"] + params["bp"]) * 100.0


if __name__ == "__main__":
    n_input1, n_input2, n_hidden, n_output = 6, 10, 32, 1
    batch = 24  # deliberately not a multiple of 8 to exercise the padding path

    key = jax.random.PRNGKey(0)
    k_x, k_p = jax.random.split(key)
    x = jax.random.normal(k_x, (batch, n_input1 + n_input2), jnp.float32)
    params = init_params(k_p, n_input1, n_input2, n_hidden, n_output)

    ref = jax.block_until_ready(reference_forward(x, params, n_input1))

    # f32 path (tolerance allows for MXU f32 matmul precision + the exact BN fold)
    out = jax.block_until_ready(lamnet_forward(x, params, n_input1))
    assert out.shape == (batch, n_output)
    np.testing.assert_allclose(np.asarray(out), np.asarray(ref), rtol=1e-3, atol=1e-2)

    # bf16 MXU-input path (halves HBM traffic on v6e/v7x); looser tolerance.
    out_bf16 = jax.block_until_ready(
        lamnet_forward(x, params, n_input1, compute_dtype=jnp.bfloat16))
    assert out_bf16.shape == (batch, n_output)
    np.testing.assert_allclose(np.asarray(out_bf16), np.asarray(ref), rtol=5e-2, atol=1.0)

    print("KERNEL_OK")
</pallas_src>

<mosaic_0001>
module attributes {stable_mosaic.version = 11 : i64} {
  func.func @lamnet_kernel(%arg0: i32, %arg1: memref<8x128xf32, #tpu.memory_space<vmem>>, %arg2: memref<129x512xf32, #tpu.memory_space<vmem>>, %arg3: memref<513x256xf32, #tpu.memory_space<vmem>>, %arg4: memref<257x8xf32, #tpu.memory_space<vmem>>, %arg5: memref<8x8xf32, #tpu.memory_space<vmem>>) attributes {dimension_semantics = [#tpu.dimension_semantics<parallel>], iteration_bounds = array<i64: 1>, scalar_prefetch = 0 : i64, scratch_operands = 0 : i64, tpu.core_type = #tpu.core_type<tc>, window_params = [{transform_indices = @transform_0, window_bounds = array<i64: 8, 128>}, {pipeline_mode = #tpu.pipeline_mode<synchronous>, transform_indices = @transform_1, window_bounds = array<i64: 129, 512>}, {pipeline_mode = #tpu.pipeline_mode<synchronous>, transform_indices = @transform_2, window_bounds = array<i64: 513, 256>}, {pipeline_mode = #tpu.pipeline_mode<synchronous>, transform_indices = @transform_3, window_bounds = array<i64: 257, 8>}, {transform_indices = @transform_4, window_bounds = array<i64: 8, 8>}]} {
    %c0 = arith.constant 0 : index
    %c0_0 = arith.constant 0 : index
    %0 = vector.load %arg1[%c0, %c0_0] : memref<8x128xf32, #tpu.memory_space<vmem>>, vector<8x128xf32>
    %c0_1 = arith.constant 0 : index
    %c0_2 = arith.constant 0 : index
    %1 = vector.load %arg2[%c0_1, %c0_2] : memref<129x512xf32, #tpu.memory_space<vmem>>, vector<128x512xf32>
    %cst = arith.constant dense<0.000000e+00> : vector<8x512xf32>
    %2 = tpu.matmul %0, %1, %cst {dimension_numbers = #tpu.dot_dimension_numbers<[1], [0], [0], [1], [0, 0, 1, 1], [], []>} : vector<8x128xf32>, vector<128x512xf32>, vector<8x512xf32> -> vector<8x512xf32>
    %c128 = arith.constant 128 : index
    %c0_3 = arith.constant 0 : index
    %3 = vector.load %arg2[%c128, %c0_3] : memref<129x512xf32, #tpu.memory_space<vmem>>, vector<1x512xf32>
    %4 = vector.broadcast %3 : vector<1x512xf32> to vector<8x512xf32>
    %5 = arith.addf %2, %4 : vector<8x512xf32>
    %cst_4 = arith.constant 0.000000e+00 : f32
    %6 = vector.broadcast %cst_4 : f32 to vector<8x512xf32>
    %7 = arith.maximumf %5, %6 : vector<8x512xf32>
    %c0_5 = arith.constant 0 : index
    %c0_6 = arith.constant 0 : index
    %8 = vector.load %arg3[%c0_5, %c0_6] : memref<513x256xf32, #tpu.memory_space<vmem>>, vector<512x256xf32>
    %cst_7 = arith.constant dense<0.000000e+00> : vector<8x256xf32>
    %9 = tpu.matmul %7, %8, %cst_7 {dimension_numbers = #tpu.dot_dimension_numbers<[1], [0], [0], [1], [0, 0, 1, 1], [], []>} : vector<8x512xf32>, vector<512x256xf32>, vector<8x256xf32> -> vector<8x256xf32>
    %c512 = arith.constant 512 : index
    %c0_8 = arith.constant 0 : index
    %10 = vector.load %arg3[%c512, %c0_8] : memref<513x256xf32, #tpu.memory_space<vmem>>, vector<1x256xf32>
    %11 = vector.broadcast %10 : vector<1x256xf32> to vector<8x256xf32>
    %12 = arith.addf %9, %11 : vector<8x256xf32>
    %cst_9 = arith.constant 0.000000e+00 : f32
    %13 = vector.broadcast %cst_9 : f32 to vector<8x256xf32>
    %14 = arith.maximumf %12, %13 : vector<8x256xf32>
    %c0_10 = arith.constant 0 : index
    %c0_11 = arith.constant 0 : index
    %15 = vector.load %arg4[%c0_10, %c0_11] : memref<257x8xf32, #tpu.memory_space<vmem>>, vector<256x8xf32>
    %cst_12 = arith.constant dense<0.000000e+00> : vector<8x8xf32>
    %16 = tpu.matmul %14, %15, %cst_12 {dimension_numbers = #tpu.dot_dimension_numbers<[1], [0], [0], [1], [0, 0, 1, 1], [], []>} : vector<8x256xf32>, vector<256x8xf32>, vector<8x8xf32> -> vector<8x8xf32>
    %c256 = arith.constant 256 : index
    %c0_13 = arith.constant 0 : index
    %17 = vector.load %arg4[%c256, %c0_13] : memref<257x8xf32, #tpu.memory_space<vmem>>, vector<1x8xf32>
    %18 = vector.broadcast %17 : vector<1x8xf32> to vector<8x8xf32>
    %19 = arith.addf %16, %18 : vector<8x8xf32>
    %cst_14 = arith.constant 0.000000e+00 : f32
    %20 = vector.broadcast %cst_14 : f32 to vector<8x8xf32>
    %21 = arith.subf %20, %19 : vector<8x8xf32>
    %22 = math.exp %21 : vector<8x8xf32>
    %cst_15 = arith.constant 1.000000e+00 : f32
    %23 = vector.broadcast %cst_15 : f32 to vector<8x8xf32>
    %24 = arith.addf %23, %22 : vector<8x8xf32>
    %25 = tpu.reciprocal %24 : vector<8x8xf32> -> vector<8x8xf32>
    %cst_16 = arith.constant 1.000000e+02 : f32
    %26 = vector.broadcast %cst_16 : f32 to vector<8x8xf32>
    %27 = arith.mulf %26, %25 : vector<8x8xf32>
    %c0_17 = arith.constant 0 : index
    %c0_18 = arith.constant 0 : index
    %28 = vector.load %arg5[%c0_17, %c0_18] : memref<8x8xf32, #tpu.memory_space<vmem>>, vector<8x8xf32>
    tpu.vector_store %arg5[%c0_17, %c0_18], %27 {strides = array<i32>} : memref<8x8xf32, #tpu.memory_space<vmem>>, vector<8x8xf32>,
    return
  }
  func.func @transform_0(%arg0: i32) -> (i32, i32) {
    %c0_i32 = arith.constant 0 : i32
    %c0_i32_0 = arith.constant 0 : i32
    return %arg0, %c0_i32 : i32, i32
  }
  func.func @transform_1(%arg0: i32) -> (i32, i32) {
    %c0_i32 = arith.constant 0 : i32
    %c0_i32_0 = arith.constant 0 : i32
    %c0_i32_1 = arith.constant 0 : i32
    return %c0_i32, %c0_i32_0 : i32, i32
  }
  func.func @transform_2(%arg0: i32) -> (i32, i32) {
    %c0_i32 = arith.constant 0 : i32
    %c0_i32_0 = arith.constant 0 : i32
    %c0_i32_1 = arith.constant 0 : i32
    return %c0_i32, %c0_i32_0 : i32, i32
  }
  func.func @transform_3(%arg0: i32) -> (i32, i32) {
    %c0_i32 = arith.constant 0 : i32
    %c0_i32_0 = arith.constant 0 : i32
    %c0_i32_1 = arith.constant 0 : i32
    return %c0_i32, %c0_i32_0 : i32, i32
  }
  func.func @transform_4(%arg0: i32) -> (i32, i32) {
    %c0_i32 = arith.constant 0 : i32
    %c0_i32_0 = arith.constant 0 : i32
    return %arg0, %c0_i32 : i32, i32
  }
}

</mosaic_0001>

<llo_original>
// kernel: tpu_custom_call.1
$region0: #{tpu_custom_call.1}
  #allocation0 [shape = 'u32[]', space=smem, size = 0x4, offset = 0x4, fixed_abs, tag = 'smem constant byte address 0x4 - core index']
  #allocation1 [shape = 'u32[72,128]{1,0:T(1,128)}', space=vmem, size = 0x9000, scoped, tag = 'internal scratch']
  %s0 = inlined_call_operand.vmem [shape: f32[8,128], index: 0, kind: input, shape index: {}]
  %s1 = inlined_call_operand.hbm [shape: f32[129,512], index: 1, kind: input, shape index: {}]
  %s2 = inlined_call_operand.hbm [shape: f32[513,256], index: 2, kind: input, shape index: {}]
  %s3 = inlined_call_operand.vmem [shape: f32[257,8], index: 3, kind: input, shape index: {}]
  %s4 = inlined_call_operand.hbm [shape: f32[8,8], index: 4, kind: output, shape index: {}]
  %s5 = sld [smem:[#allocation0]]
  $region34: #{tpu_custom_call.1} parent=0
    _
  %s7 = ssub.s32 1, %s5
  %s8 = scalar_select 0, %s7, %s5
  $region1: #{tpu_custom_call.1} parent=0
    #allocation2 [shape = 'u8[278528]{0}', space=vmem, size = 0x44000, scoped, tag = 'input window, operand 1, single buffered']
    #allocation3 [shape = 's32[1]{0}', space=sflag, size = 0x4, scoped, tag = 'scoped memory for tpu_custom_call.1']
    #allocation4 [shape = 's32[1]{0}', space=sflag, size = 0x4, scoped, tag = 'scoped memory for tpu_custom_call.1']
    #allocation5 [shape = 'u8[532480]{0}', space=vmem, size = 0x82000, scoped, tag = 'input window, operand 2, single buffered']
    #allocation6 [shape = 's32[1]{0}', space=sflag, size = 0x4, scoped, tag = 'scoped memory for tpu_custom_call.1']
    #allocation7 [shape = 'u8[4096]{0}', space=vmem, size = 0x1000, scoped, tag = 'output window, operand 0, single buffered']
    %9 = vsyncpa [#allocation3], 0
    %10 = vsyncpa [#allocation6], 0
    %11 = vsyncpa [#allocation4], 0
    // Predicated region
    $region2: #{tpu_custom_call.1} parent=1 // pred_check
      _
    $region3: #{tpu_custom_call.1} parent=1 // pred_check_branch
      %13 = sbr.rel (0) target = $region5
    $region4: #{tpu_custom_call.1} parent=1 // pred_region
      _
    $region5: #{tpu_custom_call.1} parent=1 // pred_fallthru
      _
    // Predicated region
    $region6: #{tpu_custom_call.1} parent=1 // pred_check
      _
    $region7: #{tpu_custom_call.1} parent=1 // pred_check_branch
      %15 = sbr.rel (0) target = $region9
    $region8: #{tpu_custom_call.1} parent=1 // pred_region
      %17 = vsyncadd [#allocation3], 0
      %s18 = sshll.u32 %s1, 4
      %s19 = int_to_ptr.hbm [resolvable:$true] %s18
      %s20 = sshll.u32 [#allocation2], 4
      %s21 = int_to_ptr.vmem [resolvable:$true] %s20
      %26 = dma.hbm_to_vmem [thread:$0]  %s19, 8704, %s21, [#allocation3], 512, 512, 32
    $region9: #{tpu_custom_call.1} parent=1 // pred_fallthru
      _
    // Predicated region
    $region10: #{tpu_custom_call.1} parent=1 // pred_check
      _
    $region11: #{tpu_custom_call.1} parent=1 // pred_check_branch
      %28 = sbr.rel (0) target = $region13
    $region12: #{tpu_custom_call.1} parent=1 // pred_region
      %30 = vsyncadd [#allocation6], 0
      %s31 = sshll.u32 %s2, 4
      %s32 = int_to_ptr.hbm [resolvable:$true] %s31
      %s33 = sshll.u32 [#allocation5], 4
      %s34 = int_to_ptr.vmem [resolvable:$true] %s33
      %39 = dma.hbm_to_vmem [thread:$0]  %s32, 16640, %s34, [#allocation6], 256, 256, 16
    $region13: #{tpu_custom_call.1} parent=1 // pred_fallthru
      _
    // Predicated region
    $region14: #{tpu_custom_call.1} parent=1 // pred_check
      _
    $region15: #{tpu_custom_call.1} parent=1 // pred_check_branch
      %41 = sbr.rel (0) target = $region17
    $region16: #{tpu_custom_call.1} parent=1 // pred_region
      _
    $region17: #{tpu_custom_call.1} parent=1 // pred_fallthru
      _
    // Predicated region
    $region18: #{tpu_custom_call.1} parent=1 // pred_check
      _
    $region19: #{tpu_custom_call.1} parent=1 // pred_check_branch
      %43 = sbr.rel (0) target = $region21
    $region20: #{tpu_custom_call.1} parent=1 // pred_region
      %45 = dma.done [#allocation3], 8704
    $region21: #{tpu_custom_call.1} parent=1 // pred_fallthru
      _
    // Predicated region
    $region22: #{tpu_custom_call.1} parent=1 // pred_check
      _
    $region23: #{tpu_custom_call.1} parent=1 // pred_check_branch
      %47 = sbr.rel (0) target = $region25
    $region24: #{tpu_custom_call.1} parent=1 // pred_region
      %49 = dma.done [#allocation6], 16640
    $region25: #{tpu_custom_call.1} parent=1 // pred_fallthru
      _
    %v50 = vld [vmem:[%s0] sm:$0xff]
    %v51 = vld [vmem:[#allocation2] sm:$0xff]
    %v52 = vld [vmem:[#allocation2 + $0x8] sm:$0xff]
    %v53 = vld [vmem:[#allocation2 + $0x10] sm:$0xff]
    %v54 = vld [vmem:[#allocation2 + $0x18] sm:$0xff]
    %v55 = vld [vmem:[#allocation2 + $0x20] sm:$0xff]
    %v56 = vld [vmem:[#allocation2 + $0x28] sm:$0xff]
    %v57 = vld [vmem:[#allocation2 + $0x30] sm:$0xff]
    %v58 = vld [vmem:[#allocation2 + $0x38] sm:$0xff]
    %v59 = vld [vmem:[#allocation2 + $0x40] sm:$0xff]
    %v60 = vld [vmem:[#allocation2 + $0x48] sm:$0xff]
    %v61 = vld [vmem:[#allocation2 + $0x50] sm:$0xff]
    %v62 = vld [vmem:[#allocation2 + $0x58] sm:$0xff]
    %v63 = vld [vmem:[#allocation2 + $0x60] sm:$0xff]
    %v64 = vld [vmem:[#allocation2 + $0x68] sm:$0xff]
    %v65 = vld [vmem:[#allocation2 + $0x70] sm:$0xff]
    %v66 = vld [vmem:[#allocation2 + $0x78] sm:$0xff]
    %v67 = vld [vmem:[#allocation2 + $0x80] sm:$0xff]
    %v68 = vld [vmem:[#allocation2 + $0x88] sm:$0xff]
    %v69 = vld [vmem:[#allocation2 + $0x90] sm:$0xff]
    %v70 = vld [vmem:[#allocation2 + $0x98] sm:$0xff]
    %v71 = vld [vmem:[#allocation2 + $0xa0] sm:$0xff]
    %v72 = vld [vmem:[#allocation2 + $0xa8] sm:$0xff]
    %v73 = vld [vmem:[#allocation2 + $0xb0] sm:$0xff]
    %v74 = vld [vmem:[#allocation2 + $0xb8] sm:$0xff]
    %v75 = vld [vmem:[#allocation2 + $0xc0] sm:$0xff]
    %v76 = vld [vmem:[#allocation2 + $0xc8] sm:$0xff]
    %v77 = vld [vmem:[#allocation2 + $0xd0] sm:$0xff]
    %v78 = vld [vmem:[#allocation2 + $0xd8] sm:$0xff]
    %v79 = vld [vmem:[#allocation2 + $0xe0] sm:$0xff]
    %v80 = vld [vmem:[#allocation2 + $0xe8] sm:$0xff]
    %v81 = vld [vmem:[#allocation2 + $0xf0] sm:$0xff]
    %v82 = vld [vmem:[#allocation2 + $0xf8] sm:$0xff]
    %v83 = vld [vmem:[#allocation2 + $0x100] sm:$0xff]
    %v84 = vld [vmem:[#allocation2 + $0x108] sm:$0xff]
    %v85 = vld [vmem:[#allocation2 + $0x110] sm:$0xff]
    %v86 = vld [vmem:[#allocation2 + $0x118] sm:$0xff]
    %v87 = vld [vmem:[#allocation2 + $0x120] sm:$0xff]
    %v88 = vld [vmem:[#allocation2 + $0x128] sm:$0xff]
    %v89 = vld [vmem:[#allocation2 + $0x130] sm:$0xff]
    %v90 = vld [vmem:[#allocation2 + $0x138] sm:$0xff]
    %v91 = vld [vmem:[#allocation2 + $0x140] sm:$0xff]
    %v92 = vld [vmem:[#allocation2 + $0x148] sm:$0xff]
    %v93 = vld [vmem:[#allocation2 + $0x150] sm:$0xff]
    %v94 = vld [vmem:[#allocation2 + $0x158] sm:$0xff]
    %v95 = vld [vmem:[#allocation2 + $0x160] sm:$0xff]
    %v96 = vld [vmem:[#allocation2 + $0x168] sm:$0xff]
    %v97 = vld [vmem:[#allocation2 + $0x170] sm:$0xff]
    %v98 = vld [vmem:[#allocation2 + $0x178] sm:$0xff]
    %v99 = vld [vmem:[#allocation2 + $0x180] sm:$0xff]
    %v100 = vld [vmem:[#allocation2 + $0x188] sm:$0xff]
    %v101 = vld [vmem:[#allocation2 + $0x190] sm:$0xff]
    %v102 = vld [vmem:[#allocation2 + $0x198] sm:$0xff]
    %v103 = vld [vmem:[#allocation2 + $0x1a0] sm:$0xff]
    %v104 = vld [vmem:[#allocation2 + $0x1a8] sm:$0xff]
    %v105 = vld [vmem:[#allocation2 + $0x1b0] sm:$0xff]
    %v106 = vld [vmem:[#allocation2 + $0x1b8] sm:$0xff]
    %v107 = vld [vmem:[#allocation2 + $0x1c0] sm:$0xff]
    %v108 = vld [vmem:[#allocation2 + $0x1c8] sm:$0xff]
    %v109 = vld [vmem:[#allocation2 + $0x1d0] sm:$0xff]
    %v110 = vld [vmem:[#allocation2 + $0x1d8] sm:$0xff]
    %v111 = vld [vmem:[#allocation2 + $0x1e0] sm:$0xff]
    %v112 = vld [vmem:[#allocation2 + $0x1e8] sm:$0xff]
    %v113 = vld [vmem:[#allocation2 + $0x1f0] sm:$0xff]
    %v114 = vld [vmem:[#allocation2 + $0x1f8] sm:$0xff]
    %s115 = scalar_lea.vmem [#allocation2], 512
    %v116 = vld [vmem:[%s115] ss:$8 sm:$0xf]
    %v118 = vperm.slane %v116, 0
    %v119 = vperm.slane %v116, 1
    %v120 = vperm.slane %v116, 2
    %v121 = vperm.slane %v116, 3
    %126 = vmatpush.msra.mxu0 %v111
    %127 = vmatpush.msra.mxu0 %v107
    %128 = vmatpush.msra.mxu0 %v103
    %129 = vmatpush.msra.mxu0 %v99
    %130 = vmatpush.msra.mxu0 %v95
    %131 = vmatpush.msra.mxu0 %v91
    %132 = vmatpush.msra.mxu0 %v87
    %133 = vmatpush.msra.mxu0 %v83
    %134 = vmatpush.msra.mxu0 %v79
    %135 = vmatpush.msra.mxu0 %v75
    %136 = vmatpush.msra.mxu0 %v71
    %137 = vmatpush.msra.mxu0 %v67
    %138 = vmatpush.msra.mxu0 %v63
    %139 = vmatpush.msra.mxu0 %v59
    %140 = vmatpush.msra.mxu0 %v55
    %141 = vmatpush.msra.mxu0 %v51
    %142 = vmatmul.f32.gmra.mxu0 %v50
    %v143 = vpop.f32.mrf.mxu0
    %v144 = vadd.f32 %v118, %v143
    %145 = vdwg.mxu0
    %146 = vmatpush.msra.mxu0 %v112
    %147 = vmatpush.msra.mxu0 %v108
    %148 = vmatpush.msra.mxu0 %v104
    %149 = vmatpush.msra.mxu0 %v100
    %150 = vmatpush.msra.mxu0 %v96
    %151 = vmatpush.msra.mxu0 %v92
    %152 = vmatpush.msra.mxu0 %v88
    %153 = vmatpush.msra.mxu0 %v84
    %154 = vmatpush.msra.mxu0 %v80
    %155 = vmatpush.msra.mxu0 %v76
    %156 = vmatpush.msra.mxu0 %v72
    %157 = vmatpush.msra.mxu0 %v68
    %158 = vmatpush.msra.mxu0 %v64
    %159 = vmatpush.msra.mxu0 %v60
    %160 = vmatpush.msra.mxu0 %v56
    %161 = vmatpush.msra.mxu0 %v52
    %162 = vmatmul.f32.gmra.mxu0 %v50
    %v163 = vpop.f32.mrf.mxu0
    %v164 = vadd.f32 %v119, %v163
    %165 = vdwg.mxu0
    %166 = vmatpush.msra.mxu0 %v113
    %167 = vmatpush.msra.mxu0 %v109
    %168 = vmatpush.msra.mxu0 %v105
    %169 = vmatpush.msra.mxu0 %v101
    %170 = vmatpush.msra.mxu0 %v97
    %171 = vmatpush.msra.mxu0 %v93
    %172 = vmatpush.msra.mxu0 %v89
    %173 = vmatpush.msra.mxu0 %v85
    %174 = vmatpush.msra.mxu0 %v81
    %175 = vmatpush.msra.mxu0 %v77
    %176 = vmatpush.msra.mxu0 %v73
    %177 = vmatpush.msra.mxu0 %v69
    %178 = vmatpush.msra.mxu0 %v65
    %179 = vmatpush.msra.mxu0 %v61
    %180 = vmatpush.msra.mxu0 %v57
    %181 = vmatpush.msra.mxu0 %v53
    %182 = vmatmul.f32.gmra.mxu0 %v50
    %v183 = vpop.f32.mrf.mxu0
    %v184 = vadd.f32 %v120, %v183
    %185 = vdwg.mxu0
    %186 = vmatpush.msra.mxu0 %v114
    %187 = vmatpush.msra.mxu0 %v110
    %188 = vmatpush.msra.mxu0 %v106
    %189 = vmatpush.msra.mxu0 %v102
    %190 = vmatpush.msra.mxu0 %v98
    %191 = vmatpush.msra.mxu0 %v94
    %192 = vmatpush.msra.mxu0 %v90
    %193 = vmatpush.msra.mxu0 %v86
    %194 = vmatpush.msra.mxu0 %v82
    %195 = vmatpush.msra.mxu0 %v78
    %196 = vmatpush.msra.mxu0 %v74
    %197 = vmatpush.msra.mxu0 %v70
    %198 = vmatpush.msra.mxu0 %v66
    %199 = vmatpush.msra.mxu0 %v62
    %200 = vmatpush.msra.mxu0 %v58
    %201 = vmatpush.msra.mxu0 %v54
    %202 = vmatmul.f32.gmra.mxu0 %v50
    %v203 = vpop.f32.mrf.mxu0
    %v204 = vadd.f32 %v121, %v203
    %205 = vdwg.mxu0
    %v206 = vmax.f32 %v144, 0.0
    %v207 = vmax.f32 %v164, 0.0
    %v208 = vmax.f32 %v184, 0.0
    %v209 = vmax.f32 %v204, 0.0
    %v210 = vld [vmem:[#allocation5] sm:$0xff]
    %v211 = vld [vmem:[#allocation5 + $0x8] sm:$0xff]
    %v212 = vld [vmem:[#allocation5 + $0x10] sm:$0xff]
    %v213 = vld [vmem:[#allocation5 + $0x18] sm:$0xff]
    %v214 = vld [vmem:[#allocation5 + $0x20] sm:$0xff]
    %v215 = vld [vmem:[#allocation5 + $0x28] sm:$0xff]
    %v216 = vld [vmem:[#allocation5 + $0x30] sm:$0xff]
    %v217 = vld [vmem:[#allocation5 + $0x38] sm:$0xff]
    %v218 = vld [vmem:[#allocation5 + $0x40] sm:$0xff]
    %v219 = vld [vmem:[#allocation5 + $0x48] sm:$0xff]
    %v220 = vld [vmem:[#allocation5 + $0x50] sm:$0xff]
    %v221 = vld [vmem:[#allocation5 + $0x58] sm:$0xff]
    %v222 = vld [vmem:[#allocation5 + $0x60] sm:$0xff]
    %v223 = vld [vmem:[#allocation5 + $0x68] sm:$0xff]
    %v224 = vld [vmem:[#allocation5 + $0x70] sm:$0xff]
    %v225 = vld [vmem:[#allocation5 + $0x78] sm:$0xff]
    %v226 = vld [vmem:[#allocation5 + $0x80] sm:$0xff]
    %v227 = vld [vmem:[#allocation5 + $0x88] sm:$0xff]
    %v228 = vld [vmem:[#allocation5 + $0x90] sm:$0xff]
    %v229 = vld [vmem:[#allocation5 + $0x98] sm:$0xff]
    %v230 = vld [vmem:[#allocation5 + $0xa0] sm:$0xff]
    %v231 = vld [vmem:[#allocation5 + $0xa8] sm:$0xff]
    %v232 = vld [vmem:[#allocation5 + $0xb0] sm:$0xff]
    %v233 = vld [vmem:[#allocation5 + $0xb8] sm:$0xff]
    %v234 = vld [vmem:[#allocation5 + $0xc0] sm:$0xff]
    %v235 = vld [vmem:[#allocation5 + $0xc8] sm:$0xff]
    %v236 = vld [vmem:[#allocation5 + $0xd0] sm:$0xff]
    %v237 = vld [vmem:[#allocation5 + $0xd8] sm:$0xff]
    %v238 = vld [vmem:[#allocation5 + $0xe0] sm:$0xff]
    %v239 = vld [vmem:[#allocation5 + $0xe8] sm:$0xff]
    %v240 = vld [vmem:[#allocation5 + $0xf0] sm:$0xff]
    %v241 = vld [vmem:[#allocation5 + $0xf8] sm:$0xff]
    %v242 = vld [vmem:[#allocation5 + $0x100] sm:$0xff]
    %v243 = vld [vmem:[#allocation5 + $0x108] sm:$0xff]
    %v244 = vld [vmem:[#allocation5 + $0x110] sm:$0xff]
    %v245 = vld [vmem:[#allocation5 + $0x118] sm:$0xff]
    %v246 = vld [vmem:[#allocation5 + $0x120] sm:$0xff]
    %v247 = vld [vmem:[#allocation5 + $0x128] sm:$0xff]
    %v248 = vld [vmem:[#allocation5 + $0x130] sm:$0xff]
    %v249 = vld [vmem:[#allocation5 + $0x138] sm:$0xff]
    %v250 = vld [vmem:[#allocation5 + $0x140] sm:$0xff]
    %v251 = vld [vmem:[#allocation5 + $0x148] sm:$0xff]
    %v252 = vld [vmem:[#allocation5 + $0x150] sm:$0xff]
    %v253 = vld [vmem:[#allocation5 + $0x158] sm:$0xff]
    %v254 = vld [vmem:[#allocation5 + $0x160] sm:$0xff]
    %v255 = vld [vmem:[#allocation5 + $0x168] sm:$0xff]
    %v256 = vld [vmem:[#allocation5 + $0x170] sm:$0xff]
    %v257 = vld [vmem:[#allocation5 + $0x178] sm:$0xff]
    %v258 = vld [vmem:[#allocation5 + $0x180] sm:$0xff]
    %v259 = vld [vmem:[#allocation5 + $0x188] sm:$0xff]
    %v260 = vld [vmem:[#allocation5 + $0x190] sm:$0xff]
    %v261 = vld [vmem:[#allocation5 + $0x198] sm:$0xff]
    %v262 = vld [vmem:[#allocation5 + $0x1a0] sm:$0xff]
    %v263 = vld [vmem:[#allocation5 + $0x1a8] sm:$0xff]
    %v264 = vld [vmem:[#allocation5 + $0x1b0] sm:$0xff]
    %v265 = vld [vmem:[#allocation5 + $0x1b8] sm:$0xff]
    %v266 = vld [vmem:[#allocation5 + $0x1c0] sm:$0xff]
    %v267 = vld [vmem:[#allocation5 + $0x1c8] sm:$0xff]
    %v268 = vld [vmem:[#allocation5 + $0x1d0] sm:$0xff]
    %v269 = vld [vmem:[#allocation5 + $0x1d8] sm:$0xff]
    %v270 = vld [vmem:[#allocation5 + $0x1e0] sm:$0xff]
    %v271 = vld [vmem:[#allocation5 + $0x1e8] sm:$0xff]
    %v272 = vld [vmem:[#allocation5 + $0x1f0] sm:$0xff]
    %v273 = vld [vmem:[#allocation5 + $0x1f8] sm:$0xff]
    %v274 = vld [vmem:[#allocation5 + $0x200] sm:$0xff]
    %v275 = vld [vmem:[#allocation5 + $0x208] sm:$0xff]
    %v276 = vld [vmem:[#allocation5 + $0x210] sm:$0xff]
    %v277 = vld [vmem:[#allocation5 + $0x218] sm:$0xff]
    %v278 = vld [vmem:[#allocation5 + $0x220] sm:$0xff]
    %v279 = vld [vmem:[#allocation5 + $0x228] sm:$0xff]
    %v280 = vld [vmem:[#allocation5 + $0x230] sm:$0xff]
    %v281 = vld [vmem:[#allocation5 + $0x238] sm:$0xff]
    %v282 = vld [vmem:[#allocation5 + $0x240] sm:$0xff]
    %v283 = vld [vmem:[#allocation5 + $0x248] sm:$0xff]
    %v284 = vld [vmem:[#allocation5 + $0x250] sm:$0xff]
    %v285 = vld [vmem:[#allocation5 + $0x258] sm:$0xff]
    %v286 = vld [vmem:[#allocation5 + $0x260] sm:$0xff]
    %v287 = vld [vmem:[#allocation5 + $0x268] sm:$0xff]
    %v288 = vld [vmem:[#allocation5 + $0x270] sm:$0xff]
    %v289 = vld [vmem:[#allocation5 + $0x278] sm:$0xff]
    %v290 = vld [vmem:[#allocation5 + $0x280] sm:$0xff]
    %v291 = vld [vmem:[#allocation5 + $0x288] sm:$0xff]
    %v292 = vld [vmem:[#allocation5 + $0x290] sm:$0xff]
    %v293 = vld [vmem:[#allocation5 + $0x298] sm:$0xff]
    %v294 = vld [vmem:[#allocation5 + $0x2a0] sm:$0xff]
    %v295 = vld [vmem:[#allocation5 + $0x2a8] sm:$0xff]
    %v296 = vld [vmem:[#allocation5 + $0x2b0] sm:$0xff]
    %v297 = vld [vmem:[#allocation5 + $0x2b8] sm:$0xff]
    %v298 = vld [vmem:[#allocation5 + $0x2c0] sm:$0xff]
    %v299 = vld [vmem:[#allocation5 + $0x2c8] sm:$0xff]
    %v300 = vld [vmem:[#allocation5 + $0x2d0] sm:$0xff]
    %v301 = vld [vmem:[#allocation5 + $0x2d8] sm:$0xff]
    %v302 = vld [vmem:[#allocation5 + $0x2e0] sm:$0xff]
    %v303 = vld [vmem:[#allocation5 + $0x2e8] sm:$0xff]
    %v304 = vld [vmem:[#allocation5 + $0x2f0] sm:$0xff]
    %v305 = vld [vmem:[#allocation5 + $0x2f8] sm:$0xff]
    %v306 = vld [vmem:[#allocation5 + $0x300] sm:$0xff]
    %v307 = vld [vmem:[#allocation5 + $0x308] sm:$0xff]
    %v308 = vld [vmem:[#allocation5 + $0x310] sm:$0xff]
    %v309 = vld [vmem:[#allocation5 + $0x318] sm:$0xff]
    %v310 = vld [vmem:[#allocation5 + $0x320] sm:$0xff]
    %v311 = vld [vmem:[#allocation5 + $0x328] sm:$0xff]
    %v312 = vld [vmem:[#allocation5 + $0x330] sm:$0xff]
    %v313 = vld [vmem:[#allocation5 + $0x338] sm:$0xff]
    %v314 = vld [vmem:[#allocation5 + $0x340] sm:$0xff]
    %v315 = vld [vmem:[#allocation5 + $0x348] sm:$0xff]
    %v316 = vld [vmem:[#allocation5 + $0x350] sm:$0xff]
    %v317 = vld [vmem:[#allocation5 + $0x358] sm:$0xff]
    %v318 = vld [vmem:[#allocation5 + $0x360] sm:$0xff]
    %v319 = vld [vmem:[#allocation5 + $0x368] sm:$0xff]
    %v320 = vld [vmem:[#allocation5 + $0x370] sm:$0xff]
    %v321 = vld [vmem:[#allocation5 + $0x378] sm:$0xff]
    %v322 = vld [vmem:[#allocation5 + $0x380] sm:$0xff]
    %v323 = vld [vmem:[#allocation5 + $0x388] sm:$0xff]
    %v324 = vld [vmem:[#allocation5 + $0x390] sm:$0xff]
    %v325 = vld [vmem:[#allocation5 + $0x398] sm:$0xff]
    %v326 = vld [vmem:[#allocation5 + $0x3a0] sm:$0xff]
    %v327 = vld [vmem:[#allocation5 + $0x3a8] sm:$0xff]
    %v328 = vld [vmem:[#allocation5 + $0x3b0] sm:$0xff]
    %v329 = vld [vmem:[#allocation5 + $0x3b8] sm:$0xff]
    %v330 = vld [vmem:[#allocation5 + $0x3c0] sm:$0xff]
    %v331 = vld [vmem:[#allocation5 + $0x3c8] sm:$0xff]
    %v332 = vld [vmem:[#allocation5 + $0x3d0] sm:$0xff]
    %v333 = vld [vmem:[#allocation5 + $0x3d8] sm:$0xff]
    %v334 = vld [vmem:[#allocation5 + $0x3e0] sm:$0xff]
    %v335 = vld [vmem:[#allocation5 + $0x3e8] sm:$0xff]
    %v336 = vld [vmem:[#allocation5 + $0x3f0] sm:$0xff]
    %v337 = vld [vmem:[#allocation5 + $0x3f8] sm:$0xff]
    %s338 = scalar_lea.vmem [#allocation5], 1024
    %v339 = vld [vmem:[%s338] ss:$8 sm:$0x3]
    %v341 = vperm.slane %v339, 0
    %v342 = vperm.slane %v339, 1
    %345 = vmatpush.msra.mxu0 %v240
    %346 = vmatpush.msra.mxu0 %v238
    %347 = vmatpush.msra.mxu0 %v236
    %348 = vmatpush.msra.mxu0 %v234
    %349 = vmatpush.msra.mxu0 %v232
    %350 = vmatpush.msra.mxu0 %v230
    %351 = vmatpush.msra.mxu0 %v228
    %352 = vmatpush.msra.mxu0 %v226
    %353 = vmatpush.msra.mxu0 %v224
    %354 = vmatpush.msra.mxu0 %v222
    %355 = vmatpush.msra.mxu0 %v220
    %356 = vmatpush.msra.mxu0 %v218
    %357 = vmatpush.msra.mxu0 %v216
    %358 = vmatpush.msra.mxu0 %v214
    %359 = vmatpush.msra.mxu0 %v212
    %360 = vmatpush.msra.mxu0 %v210
    %361 = vmatmul.f32.gmra.mxu0 %v206
    %v362 = vpop.f32.mrf.mxu0
    %v363 = vadd.f32 %v341, %v362
    %364 = vdwg.mxu0
    %365 = vmatpush.msra.mxu0 %v272
    %366 = vmatpush.msra.mxu0 %v270
    %367 = vmatpush.msra.mxu0 %v268
    %368 = vmatpush.msra.mxu0 %v266
    %369 = vmatpush.msra.mxu0 %v264
    %370 = vmatpush.msra.mxu0 %v262
    %371 = vmatpush.msra.mxu0 %v260
    %372 = vmatpush.msra.mxu0 %v258
    %373 = vmatpush.msra.mxu0 %v256
    %374 = vmatpush.msra.mxu0 %v254
    %375 = vmatpush.msra.mxu0 %v252
    %376 = vmatpush.msra.mxu0 %v250
    %377 = vmatpush.msra.mxu0 %v248
    %378 = vmatpush.msra.mxu0 %v246
    %379 = vmatpush.msra.mxu0 %v244
    %380 = vmatpush.msra.mxu0 %v242
    %381 = vmatmul.f32.gmra.mxu0 %v207
    %v382 = vpop.f32.mrf.mxu0
    %v383 = vadd.f32 %v363, %v382
    %384 = vdwg.mxu0
    %385 = vmatpush.msra.mxu0 %v304
    %386 = vmatpush.msra.mxu0 %v302
    %387 = vmatpush.msra.mxu0 %v300
    %388 = vmatpush.msra.mxu0 %v298
    %389 = vmatpush.msra.mxu0 %v296
    %390 = vmatpush.msra.mxu0 %v294
    %391 = vmatpush.msra.mxu0 %v292
    %392 = vmatpush.msra.mxu0 %v290
    %393 = vmatpush.msra.mxu0 %v288
    %394 = vmatpush.msra.mxu0 %v286
    %395 = vmatpush.msra.mxu0 %v284
    %396 = vmatpush.msra.mxu0 %v282
    %397 = vmatpush.msra.mxu0 %v280
    %398 = vmatpush.msra.mxu0 %v278
    %399 = vmatpush.msra.mxu0 %v276
    %400 = vmatpush.msra.mxu0 %v274
    %401 = vmatmul.f32.gmra.mxu0 %v208
    %v402 = vpop.f32.mrf.mxu0
    %v403 = vadd.f32 %v383, %v402
    %404 = vdwg.mxu0
    %405 = vmatpush.msra.mxu0 %v336
    %406 = vmatpush.msra.mxu0 %v334
    %407 = vmatpush.msra.mxu0 %v332
    %408 = vmatpush.msra.mxu0 %v330
    %409 = vmatpush.msra.mxu0 %v328
    %410 = vmatpush.msra.mxu0 %v326
    %411 = vmatpush.msra.mxu0 %v324
    %412 = vmatpush.msra.mxu0 %v322
    %413 = vmatpush.msra.mxu0 %v320
    %414 = vmatpush.msra.mxu0 %v318
    %415 = vmatpush.msra.mxu0 %v316
    %416 = vmatpush.msra.mxu0 %v314
    %417 = vmatpush.msra.mxu0 %v312
    %418 = vmatpush.msra.mxu0 %v310
    %419 = vmatpush.msra.mxu0 %v308
    %420 = vmatpush.msra.mxu0 %v306
    %421 = vmatmul.f32.gmra.mxu0 %v209
    %v422 = vpop.f32.mrf.mxu0
    %v423 = vadd.f32 %v403, %v422
    %424 = vdwg.mxu0
    %425 = vmatpush.msra.mxu0 %v241
    %426 = vmatpush.msra.mxu0 %v239
    %427 = vmatpush.msra.mxu0 %v237
    %428 = vmatpush.msra.mxu0 %v235
    %429 = vmatpush.msra.mxu0 %v233
    %430 = vmatpush.msra.mxu0 %v231
    %431 = vmatpush.msra.mxu0 %v229
    %432 = vmatpush.msra.mxu0 %v227
    %433 = vmatpush.msra.mxu0 %v225
    %434 = vmatpush.msra.mxu0 %v223
    %435 = vmatpush.msra.mxu0 %v221
    %436 = vmatpush.msra.mxu0 %v219
    %437 = vmatpush.msra.mxu0 %v217
    %438 = vmatpush.msra.mxu0 %v215
    %439 = vmatpush.msra.mxu0 %v213
    %440 = vmatpush.msra.mxu0 %v211
    %441 = vmatmul.f32.gmra.mxu0 %v206
    %v442 = vpop.f32.mrf.mxu0
    %v443 = vadd.f32 %v342, %v442
    %444 = vdwg.mxu0
    %445 = vmatpush.msra.mxu0 %v273
    %446 = vmatpush.msra.mxu0 %v271
    %447 = vmatpush.msra.mxu0 %v269
    %448 = vmatpush.msra.mxu0 %v267
    %449 = vmatpush.msra.mxu0 %v265
    %450 = vmatpush.msra.mxu0 %v263
    %451 = vmatpush.msra.mxu0 %v261
    %452 = vmatpush.msra.mxu0 %v259
    %453 = vmatpush.msra.mxu0 %v257
    %454 = vmatpush.msra.mxu0 %v255
    %455 = vmatpush.msra.mxu0 %v253
    %456 = vmatpush.msra.mxu0 %v251
    %457 = vmatpush.msra.mxu0 %v249
    %458 = vmatpush.msra.mxu0 %v247
    %459 = vmatpush.msra.mxu0 %v245
    %460 = vmatpush.msra.mxu0 %v243
    %461 = vmatmul.f32.gmra.mxu0 %v207
    %v462 = vpop.f32.mrf.mxu0
    %v463 = vadd.f32 %v443, %v462
    %464 = vdwg.mxu0
    %465 = vmatpush.msra.mxu0 %v305
    %466 = vmatpush.msra.mxu0 %v303
    %467 = vmatpush.msra.mxu0 %v301
    %468 = vmatpush.msra.mxu0 %v299
    %469 = vmatpush.msra.mxu0 %v297
    %470 = vmatpush.msra.mxu0 %v295
    %471 = vmatpush.msra.mxu0 %v293
    %472 = vmatpush.msra.mxu0 %v291
    %473 = vmatpush.msra.mxu0 %v289
    %474 = vmatpush.msra.mxu0 %v287
    %475 = vmatpush.msra.mxu0 %v285
    %476 = vmatpush.msra.mxu0 %v283
    %477 = vmatpush.msra.mxu0 %v281
    %478 = vmatpush.msra.mxu0 %v279
    %479 = vmatpush.msra.mxu0 %v277
    %480 = vmatpush.msra.mxu0 %v275
    %481 = vmatmul.f32.gmra.mxu0 %v208
    %v482 = vpop.f32.mrf.mxu0
    %v483 = vadd.f32 %v463, %v482
    %484 = vdwg.mxu0
    %485 = vmatpush.msra.mxu0 %v337
    %486 = vmatpush.msra.mxu0 %v335
    %487 = vmatpush.msra.mxu0 %v333
    %488 = vmatpush.msra.mxu0 %v331
    %489 = vmatpush.msra.mxu0 %v329
    %490 = vmatpush.msra.mxu0 %v327
    %491 = vmatpush.msra.mxu0 %v325
    %492 = vmatpush.msra.mxu0 %v323
    %493 = vmatpush.msra.mxu0 %v321
    %494 = vmatpush.msra.mxu0 %v319
    %495 = vmatpush.msra.mxu0 %v317
    %496 = vmatpush.msra.mxu0 %v315
    %497 = vmatpush.msra.mxu0 %v313
    %498 = vmatpush.msra.mxu0 %v311
    %499 = vmatpush.msra.mxu0 %v309
    %500 = vmatpush.msra.mxu0 %v307
    %501 = vmatmul.f32.gmra.mxu0 %v209
    %v502 = vpop.f32.mrf.mxu0
    %v503 = vadd.f32 %v483, %v502
    %504 = vdwg.mxu0
    %v505 = vmax.f32 %v423, 0.0
    %v506 = vmax.f32 %v503, 0.0
    %v507 = vld [vmem:[%s3] sm:$0xff]
    %v508 = vld [vmem:[%s3 + $0x8] sm:$0xff]
    %v509 = vld [vmem:[%s3 + $0x10] sm:$0xff]
    %v510 = vld [vmem:[%s3 + $0x18] sm:$0xff]
    %v511 = vld [vmem:[%s3 + $0x20] sm:$0xff]
    %v512 = vld [vmem:[%s3 + $0x28] sm:$0xff]
    %v513 = vld [vmem:[%s3 + $0x30] sm:$0xff]
    %v514 = vld [vmem:[%s3 + $0x38] sm:$0xff]
    %v515 = vld [vmem:[%s3 + $0x40] sm:$0xff]
    %v516 = vld [vmem:[%s3 + $0x48] sm:$0xff]
    %v517 = vld [vmem:[%s3 + $0x50] sm:$0xff]
    %v518 = vld [vmem:[%s3 + $0x58] sm:$0xff]
    %v519 = vld [vmem:[%s3 + $0x60] sm:$0xff]
    %v520 = vld [vmem:[%s3 + $0x68] sm:$0xff]
    %v521 = vld [vmem:[%s3 + $0x70] sm:$0xff]
    %v522 = vld [vmem:[%s3 + $0x78] sm:$0xff]
    %v523 = vld [vmem:[%s3 + $0x80] sm:$0xff]
    %v524 = vld [vmem:[%s3 + $0x88] sm:$0xff]
    %v525 = vld [vmem:[%s3 + $0x90] sm:$0xff]
    %v526 = vld [vmem:[%s3 + $0x98] sm:$0xff]
    %v527 = vld [vmem:[%s3 + $0xa0] sm:$0xff]
    %v528 = vld [vmem:[%s3 + $0xa8] sm:$0xff]
    %v529 = vld [vmem:[%s3 + $0xb0] sm:$0xff]
    %v530 = vld [vmem:[%s3 + $0xb8] sm:$0xff]
    %v531 = vld [vmem:[%s3 + $0xc0] sm:$0xff]
    %v532 = vld [vmem:[%s3 + $0xc8] sm:$0xff]
    %v533 = vld [vmem:[%s3 + $0xd0] sm:$0xff]
    %v534 = vld [vmem:[%s3 + $0xd8] sm:$0xff]
    %v535 = vld [vmem:[%s3 + $0xe0] sm:$0xff]
    %v536 = vld [vmem:[%s3 + $0xe8] sm:$0xff]
    %v537 = vld [vmem:[%s3 + $0xf0] sm:$0xff]
    %v538 = vld [vmem:[%s3 + $0xf8] sm:$0xff]
    %v539 = vld [vmem:[%s3 + $0x100] sm:$0x1]
    %v540 = vperm.slane %v539, 0
    %541 = vmatpush.msra.mxu0 %v522
    %542 = vmatpush.msra.mxu0 %v521
    %543 = vmatpush.msra.mxu0 %v520
    %544 = vmatpush.msra.mxu0 %v519
    %545 = vmatpush.msra.mxu0 %v518
    %546 = vmatpush.msra.mxu0 %v517
    %547 = vmatpush.msra.mxu0 %v516
    %548 = vmatpush.msra.mxu0 %v515
    %549 = vmatpush.msra.mxu0 %v514
    %550 = vmatpush.msra.mxu0 %v513
    %551 = vmatpush.msra.mxu0 %v512
    %552 = vmatpush.msra.mxu0 %v511
    %553 = vmatpush.msra.mxu0 %v510
    %554 = vmatpush.msra.mxu0 %v509
    %555 = vmatpush.msra.mxu0 %v508
    %556 = vmatpush.msra.mxu0 %v507
    %557 = vmatmul.f32.gmra.mxu0 %v505
    %v558 = vpop.f32.mrf.mxu0
    %v559 = vadd.f32 %v540, %v558
    %560 = vdwg.mxu0
    %561 = vmatpush.msra.mxu0 %v538
    %562 = vmatpush.msra.mxu0 %v537
    %563 = vmatpush.msra.mxu0 %v536
    %564 = vmatpush.msra.mxu0 %v535
    %565 = vmatpush.msra.mxu0 %v534
    %566 = vmatpush.msra.mxu0 %v533
    %567 = vmatpush.msra.mxu0 %v532
    %568 = vmatpush.msra.mxu0 %v531
    %569 = vmatpush.msra.mxu0 %v530
    %570 = vmatpush.msra.mxu0 %v529
    %571 = vmatpush.msra.mxu0 %v528
    %572 = vmatpush.msra.mxu0 %v527
    %573 = vmatpush.msra.mxu0 %v526
    %574 = vmatpush.msra.mxu0 %v525
    %575 = vmatpush.msra.mxu0 %v524
    %576 = vmatpush.msra.mxu0 %v523
    %577 = vmatmul.f32.gmra.mxu0 %v506
    %v578 = vpop.f32.mrf.mxu0
    %v579 = vadd.f32 %v559, %v578
    %580 = vdwg.mxu0
    %v581 = vsub.f32 0.0, %v579
    %v582 = vmul.f32 %v581, 1.442695
    %v583 = vpow.pop %v582
    %v584 = vadd.f32 %v583, 1.0
    %v585 = vrcp.pop %v584
    %v586 = vmul.f32 %v584, %v585
    %v587 = vsub.f32 1.0, %v586
    %v588 = vmul.f32 %v585, %v587
    %v589 = vadd.f32 %v585, %v588
    %vm590 = vweird.f32 %v584
    %vm591 = vweird.f32 %v585
    %vm592 = vmor %vm590, %vm591
    %v593 = vsel %vm592, %v585, %v589
    %v594 = vand.u32 2147483647, %v584
    %vm595 = vcmp.eq.f32.partialorder %v594, 8.507059e+37
    %v596 = vand.u32 %v584, 2147483648
    %v597 = vor.u32 1.1754944e-38, %v596
    %v598 = vsel %vm595, %v597, %v593
    %v599 = vmul.f32 %v598, 100.0
    %vm600 = vcmask 64512
    %601 = vst.msk [vmem:[#allocation7] sm:$0xff] %vm600, %v599
    // Predicated region
    $region26: #{tpu_custom_call.1} parent=1 // pred_check
      _
    $region27: #{tpu_custom_call.1} parent=1 // pred_check_branch
      %603 = sbr.rel (0) target = $region29
    $region28: #{tpu_custom_call.1} parent=1 // pred_region
      %605 = vsyncadd [#allocation4], 0
      %s607 = sshll.u32 [#allocation7], 4
      %s608 = int_to_ptr.vmem [resolvable:$true] %s607
      %s609 = sshll.u32 %s4, 4
      %s610 = int_to_ptr.hbm [resolvable:$true] %s609
      %612 = dma.vmem_to_hbm [thread:$0]  %s608, 128, %s610, [#allocation4]
    $region29: #{tpu_custom_call.1} parent=1 // pred_fallthru
      _
    // Predicated region
    $region30: #{tpu_custom_call.1} parent=1 // pred_check
      _
    $region31: #{tpu_custom_call.1} parent=1 // pred_check_branch
      %614 = sbr.rel (0) target = $region33
    $region32: #{tpu_custom_call.1} parent=1 // pred_region
      %616 = dma.done [#allocation4], 128
    $region33: #{tpu_custom_call.1} parent=1 // pred_fallthru
      _
    %617 = vsyncpa [#allocation3], 1
    %618 = vsyncpa [#allocation6], 1
    %619 = vsyncpa [#allocation4], 1

</llo_original>
